<compile_context>
chip_gen: v5e
topology: v5e:2x2
jax: 0.10.0
libtpu: 0.0.40
codegen_flags: <defaults>
</compile_context>

<pallas_src>
import functools

import jax
import jax.numpy as jnp
from jax import lax
from jax.experimental import pallas as pl
from jax.experimental.pallas import tpu as pltpu


def _round_up(x, m):
    return ((x + m - 1) // m) * m


def _softplus(x):
    # numerically stable softplus (VPU + EUP ops only)
    return jnp.maximum(x, 0.0) + jnp.log1p(jnp.exp(-jnp.abs(x)))


def _mlp_logits_row(x, w0, b0, w1, b1, w2, b2_scalar, matmul_dtype):
    """Fused 2-layer ReLU MLP + Linear(dim,1); returns lane-dense logits (1, tm)."""
    if matmul_dtype is not None:
        x = x.astype(matmul_dtype)
        w0 = w0.astype(matmul_dtype)
        w1 = w1.astype(matmul_dtype)
        w2 = w2.astype(matmul_dtype)
    h = jnp.dot(x, w0, preferred_element_type=jnp.float32) + b0
    h = jnp.maximum(h, 0.0)
    if matmul_dtype is not None:
        h = h.astype(matmul_dtype)
    h = jnp.dot(h, w1, preferred_element_type=jnp.float32) + b1
    h = jnp.maximum(h, 0.0)
    if matmul_dtype is not None:
        h = h.astype(matmul_dtype)
    # Linear(dim, 1) as w2 @ h^T (contract both last dims) -> (1, tm) lane-dense row.
    logits = lax.dot_general(w2, h, (((1,), (1,)), ((), ())),
                             preferred_element_type=jnp.float32) + b2_scalar
    return logits


# -----------------------------------------------------------------------------
# Kernel 1: PriorDiscriminator forward (matches the nn.Module exactly)
# -----------------------------------------------------------------------------
def prior_d_kernel(matmul_dtype, x_ref, w0_ref, b0_ref, w1_ref, b1_ref,
                   w2_ref, b2_ref, o_ref):
    logits = _mlp_logits_row(x_ref[...], w0_ref[...], b0_ref[...],
                             w1_ref[...], b1_ref[...], w2_ref[...],
                             b2_ref[0], matmul_dtype)
    # lane-dense (1, tm) store -> unmasked vst
    o_ref[...] = jax.nn.sigmoid(logits)


def prior_discriminator_forward(x, params, *, block_rows=512, matmul_dtype=None):
    """x: [N, dim] float32 -> [N, 1] sigmoid probabilities."""
    w0, b0, w1, b1, w2, b2 = params
    n, d = x.shape
    tm = min(block_rows, _round_up(n, 8))
    n_pad = _round_up(n, tm)
    if n_pad != n:
        x = jnp.pad(x, ((0, n_pad - n), (0, 0)))
    n_blocks = n_pad // tm
    cost = pl.CostEstimate(
        flops=4 * n_pad * d * d + 2 * n_pad * d,
        transcendentals=n_pad,
        bytes_accessed=(n_pad * d + 2 * d * d + 3 * d + 1 + n_pad) * 4)
    out = pl.pallas_call(
        functools.partial(prior_d_kernel, matmul_dtype),
        out_shape=jax.ShapeDtypeStruct((n_blocks, tm), jnp.float32),
        grid=(n_blocks,),
        in_specs=[
            pl.BlockSpec((tm, d), lambda i: (i, 0)),   # x rows tiled over the grid
            pl.BlockSpec((d, d), lambda i: (0, 0)),    # W0 (resident across steps)
            pl.BlockSpec((1, d), lambda i: (0, 0)),    # b0
            pl.BlockSpec((d, d), lambda i: (0, 0)),    # W1
            pl.BlockSpec((1, d), lambda i: (0, 0)),    # b1
            pl.BlockSpec((1, d), lambda i: (0, 0)),    # w2 (Linear(dim,1).weight)
            pl.BlockSpec(memory_space=pltpu.MemorySpace.SMEM),  # b2 scalar
        ],
        out_specs=pl.BlockSpec((1, tm), lambda i: (i, 0)),
        compiler_params=pltpu.CompilerParams(
            dimension_semantics=("parallel",)),
        cost_estimate=cost,
    )(x, w0, b0, w1, b1, w2, b2)
    # lane-dense (n_blocks, tm) -> module contract [N, 1]
    return out.reshape(-1)[:n].reshape(n, 1)


# -----------------------------------------------------------------------------
# Kernel 2: fused prior-matching term. No HBM concat: prior_sample and embeddings
# are separate inputs (clamped index_maps); each grid step emits a lane-dense
# (1, 128) partial-sum row (col 0 = sum log sigmoid over prior rows,
# col 1 = sum log(1-sigmoid) over embedding rows). Grid is fully "parallel"
# (distinct output block per step) so v7x can shard it across both TCs; the tiny
# final reduction happens in the wrapper.
# -----------------------------------------------------------------------------
def prior_term_kernel(matmul_dtype, n_prior, n_emb, n_prior_blocks,
                      prior_ref, emb_ref, w0_ref, b0_ref, w1_ref, b1_ref,
                      w2_ref, b2_ref, o_ref):
    i = pl.program_id(0)
    tm = prior_ref.shape[0]
    is_prior = i < n_prior_blocks

    # Both tiles are already in VMEM (inactive one has a clamped, constant block
    # index -> no extra HBM traffic); one VPU select picks the active one.
    x = jnp.where(is_prior, prior_ref[...], emb_ref[...])
    logits = _mlp_logits_row(x, w0_ref[...], b0_ref[...], w1_ref[...],
                             b1_ref[...], w2_ref[...], b2_ref[0], matmul_dtype)

    lane = lax.broadcasted_iota(jnp.int32, (1, tm), 1)
    local_start = jnp.where(is_prior, i, i - n_prior_blocks) * tm
    rows = local_start + lane
    limit = jnp.where(is_prior, n_prior, n_emb)
    valid = rows < limit                       # mask out pad rows

    log_d = -_softplus(-logits)                # log(sigmoid(logits))
    log_1md = -_softplus(logits)               # log(1 - sigmoid(logits))
    contrib = jnp.where(is_prior, log_d, log_1md)
    partial = jnp.sum(jnp.where(valid, contrib, 0.0))

    col = lax.broadcasted_iota(jnp.int32, (1, o_ref.shape[1]), 1)
    target = jnp.where(is_prior, 0, 1)
    o_ref[...] = jnp.where(col == target, partial, 0.0)


def prior_matching_term(prior_sample, embeddings, params, gamma, *,
                        block_rows=512, matmul_dtype=None):
    """PRIOR = -(E[log d(prior)] + E[log(1 - d(emb))]) * gamma, one fused call."""
    w0, b0, w1, b1, w2, b2 = params
    n_p, d = prior_sample.shape
    n_e = embeddings.shape[0]
    tm = min(block_rows, _round_up(max(n_p, n_e), 8))
    n_pp = _round_up(n_p, tm)
    n_ep = _round_up(n_e, tm)
    if n_pp != n_p:
        prior_sample = jnp.pad(prior_sample, ((0, n_pp - n_p), (0, 0)))
    if n_ep != n_e:
        embeddings = jnp.pad(embeddings, ((0, n_ep - n_e), (0, 0)))
    n_pb = n_pp // tm
    n_eb = n_ep // tm
    n_blocks = n_pb + n_eb
    total = n_pp + n_ep
    cost = pl.CostEstimate(
        flops=4 * total * d * d + 2 * total * d,
        transcendentals=2 * total,
        bytes_accessed=(total * d + 2 * d * d + 3 * d + 1 + n_blocks * 128) * 4)

    partials = pl.pallas_call(
        functools.partial(prior_term_kernel, matmul_dtype, n_p, n_e, n_pb),
        out_shape=jax.ShapeDtypeStruct((n_blocks, 128), jnp.float32),
        grid=(n_blocks,),
        in_specs=[
            # prior rows: advance during the prior phase, then stay clamped (no re-DMA)
            pl.BlockSpec((tm, d), lambda i: (jnp.minimum(i, n_pb - 1), 0)),
            # embedding rows: clamped to block 0 during the prior phase, then advance
            pl.BlockSpec((tm, d), lambda i: (jnp.maximum(i - n_pb, 0), 0)),
            pl.BlockSpec((d, d), lambda i: (0, 0)),    # W0
            pl.BlockSpec((1, d), lambda i: (0, 0)),    # b0
            pl.BlockSpec((d, d), lambda i: (0, 0)),    # W1
            pl.BlockSpec((1, d), lambda i: (0, 0)),    # b1
            pl.BlockSpec((1, d), lambda i: (0, 0)),    # w2
            pl.BlockSpec(memory_space=pltpu.MemorySpace.SMEM),  # b2 scalar
        ],
        out_specs=pl.BlockSpec((1, 128), lambda i: (i, 0)),
        compiler_params=pltpu.CompilerParams(
            dimension_semantics=("parallel",)),
        cost_estimate=cost,
    )(prior_sample, embeddings, w0, b0, w1, b1, w2, b2)

    term_a = jnp.sum(partials[:, 0]) / n_p     # E[log d(prior)] * n_p -> mean
    term_b = jnp.sum(partials[:, 1]) / n_e     # E[log(1 - d(emb))]
    return -(term_a + term_b) * gamma


# -----------------------------------------------------------------------------
# pure-JAX reference
# -----------------------------------------------------------------------------
def _ref_forward(x, params):
    w0, b0, w1, b1, w2, b2 = params
    hi = jax.lax.Precision.HIGHEST
    h = jax.nn.relu(jnp.dot(x, w0, precision=hi) + b0)
    h = jax.nn.relu(jnp.dot(h, w1, precision=hi) + b1)
    logits = jnp.dot(h, w2.T, precision=hi) + b2
    return jax.nn.sigmoid(logits), logits


if __name__ == "__main__":
    input_dim = 128           # lane-dense feature width
    num_rows = 16             # rows multiple of 8 (sublane-aligned)
    gamma = 0.1

    key = jax.random.PRNGKey(0)
    k_x, k_prior, k0, k1, k2, kb0, kb1 = jax.random.split(key, 7)

    scale = 0.1
    w0 = scale * jax.random.normal(k0, (input_dim, input_dim), jnp.float32)
    b0 = scale * jax.random.normal(kb0, (1, input_dim), jnp.float32)
    w1 = scale * jax.random.normal(k1, (input_dim, input_dim), jnp.float32)
    b1 = scale * jax.random.normal(kb1, (1, input_dim), jnp.float32)
    w2 = scale * jax.random.normal(k2, (1, input_dim), jnp.float32)  # Linear(dim,1).weight
    b2 = jnp.zeros((1,), jnp.float32)                                 # Linear(dim,1).bias
    params = (w0, b0, w1, b1, w2, b2)

    x = jax.random.normal(k_x, (num_rows, input_dim), jnp.float32)             # "embeddings"
    prior_sample = jax.random.uniform(k_prior, (num_rows, input_dim), jnp.float32)

    d_ref, lg_e = _ref_forward(x, params)

    # --- PriorDiscriminator forward, exact f32 module semantics ---
    d_x = jax.block_until_ready(prior_discriminator_forward(x, params))
    assert d_x.shape == (num_rows, 1)
    assert bool(jnp.allclose(d_x, d_ref, atol=1e-3, rtol=1e-3))

    # --- bf16-matmul fast path (v6e/v7x MXU), f32 accumulate; looser tolerance ---
    d_x_bf16 = jax.block_until_ready(
        prior_discriminator_forward(x, params, matmul_dtype=jnp.bfloat16))
    assert d_x_bf16.shape == (num_rows, 1)
    assert bool(jnp.all(jnp.isfinite(d_x_bf16)))
    assert bool(jnp.allclose(d_x_bf16, d_ref, atol=5e-2, rtol=5e-2))

    # --- fused prior-matching term (no concat, parallel per-block partial sums) ---
    prior_loss = jax.block_until_ready(
        prior_matching_term(prior_sample, x, params, gamma))
    _, lg_p = _ref_forward(prior_sample, params)
    prior_ref = -(jnp.mean(jax.nn.log_sigmoid(lg_p))
                  + jnp.mean(jax.nn.log_sigmoid(-lg_e))) * gamma
    assert bool(jnp.isfinite(prior_loss))
    assert bool(jnp.allclose(prior_loss, prior_ref, atol=1e-3, rtol=1e-3))

    print("KERNEL_OK")
</pallas_src>

<mosaic_0001>
module attributes {stable_mosaic.version = 11 : i64} {
  func.func @prior_d_kernel(%arg0: i32, %arg1: memref<16x128xf32, #tpu.memory_space<vmem>>, %arg2: memref<128x128xf32, #tpu.memory_space<vmem>>, %arg3: memref<1x128xf32, #tpu.memory_space<vmem>>, %arg4: memref<128x128xf32, #tpu.memory_space<vmem>>, %arg5: memref<1x128xf32, #tpu.memory_space<vmem>>, %arg6: memref<1x128xf32, #tpu.memory_space<vmem>>, %arg7: memref<1xf32, #tpu.memory_space<smem>>, %arg8: memref<1x16xf32, #tpu.memory_space<vmem>>) attributes {dimension_semantics = [#tpu.dimension_semantics<parallel>], iteration_bounds = array<i64: 1>, scalar_prefetch = 0 : i64, scratch_operands = 0 : i64, tpu.core_type = #tpu.core_type<tc>, window_params = [{transform_indices = @transform_0, window_bounds = array<i64: 16, 128>}, {pipeline_mode = #tpu.pipeline_mode<synchronous>, transform_indices = @transform_1, window_bounds = array<i64: 128, 128>}, {pipeline_mode = #tpu.pipeline_mode<synchronous>, transform_indices = @transform_2, window_bounds = array<i64: 1, 128>}, {pipeline_mode = #tpu.pipeline_mode<synchronous>, transform_indices = @transform_3, window_bounds = array<i64: 128, 128>}, {pipeline_mode = #tpu.pipeline_mode<synchronous>, transform_indices = @transform_4, window_bounds = array<i64: 1, 128>}, {pipeline_mode = #tpu.pipeline_mode<synchronous>, transform_indices = @transform_5, window_bounds = array<i64: 1, 128>}, {transform_indices = @transform_6, window_bounds = array<i64: 1>}, {transform_indices = @transform_7, window_bounds = array<i64: 1, 16>}]} {
    %c0 = arith.constant 0 : index
    %c0_0 = arith.constant 0 : index
    %0 = vector.load %arg1[%c0, %c0_0] : memref<16x128xf32, #tpu.memory_space<vmem>>, vector<16x128xf32>
    %c0_1 = arith.constant 0 : index
    %c0_2 = arith.constant 0 : index
    %1 = vector.load %arg2[%c0_1, %c0_2] : memref<128x128xf32, #tpu.memory_space<vmem>>, vector<128x128xf32>
    %c0_3 = arith.constant 0 : index
    %c0_4 = arith.constant 0 : index
    %2 = vector.load %arg3[%c0_3, %c0_4] : memref<1x128xf32, #tpu.memory_space<vmem>>, vector<1x128xf32>
    %c0_5 = arith.constant 0 : index
    %c0_6 = arith.constant 0 : index
    %3 = vector.load %arg4[%c0_5, %c0_6] : memref<128x128xf32, #tpu.memory_space<vmem>>, vector<128x128xf32>
    %c0_7 = arith.constant 0 : index
    %c0_8 = arith.constant 0 : index
    %4 = vector.load %arg5[%c0_7, %c0_8] : memref<1x128xf32, #tpu.memory_space<vmem>>, vector<1x128xf32>
    %c0_9 = arith.constant 0 : index
    %c0_10 = arith.constant 0 : index
    %5 = vector.load %arg6[%c0_9, %c0_10] : memref<1x128xf32, #tpu.memory_space<vmem>>, vector<1x128xf32>
    %c0_11 = arith.constant 0 : index
    %6 = memref.load %arg7[%c0_11] : memref<1xf32, #tpu.memory_space<smem>>
    %cst = arith.constant dense<0.000000e+00> : vector<16x128xf32>
    %7 = tpu.matmul %0, %1, %cst {dimension_numbers = #tpu.dot_dimension_numbers<[1], [0], [0], [1], [0, 0, 1, 1], [], []>} : vector<16x128xf32>, vector<128x128xf32>, vector<16x128xf32> -> vector<16x128xf32>
    %8 = vector.broadcast %2 : vector<1x128xf32> to vector<16x128xf32>
    %9 = arith.addf %7, %8 : vector<16x128xf32>
    %cst_12 = arith.constant 0.000000e+00 : f32
    %10 = vector.broadcast %cst_12 : f32 to vector<16x128xf32>
    %11 = arith.maximumf %9, %10 : vector<16x128xf32>
    %cst_13 = arith.constant dense<0.000000e+00> : vector<16x128xf32>
    %12 = tpu.matmul %11, %3, %cst_13 {dimension_numbers = #tpu.dot_dimension_numbers<[1], [0], [0], [1], [0, 0, 1, 1], [], []>} : vector<16x128xf32>, vector<128x128xf32>, vector<16x128xf32> -> vector<16x128xf32>
    %13 = vector.broadcast %4 : vector<1x128xf32> to vector<16x128xf32>
    %14 = arith.addf %12, %13 : vector<16x128xf32>
    %cst_14 = arith.constant 0.000000e+00 : f32
    %15 = vector.broadcast %cst_14 : f32 to vector<16x128xf32>
    %16 = arith.maximumf %14, %15 : vector<16x128xf32>
    %cst_15 = arith.constant dense<0.000000e+00> : vector<1x16xf32>
    %17 = tpu.matmul %5, %16, %cst_15 {dimension_numbers = #tpu.dot_dimension_numbers<[1], [1], [0], [0], [0, 0, 1, 0], [], []>} : vector<1x128xf32>, vector<16x128xf32>, vector<1x16xf32> -> vector<1x16xf32>
    %18 = vector.broadcast %6 : f32 to vector<1x16xf32>
    %19 = arith.addf %17, %18 : vector<1x16xf32>
    %20 = arith.negf %19 : vector<1x16xf32>
    %21 = math.exp %20 : vector<1x16xf32>
    %cst_16 = arith.constant 1.000000e+00 : f32
    %22 = vector.broadcast %cst_16 : f32 to vector<1x16xf32>
    %23 = arith.addf %22, %21 : vector<1x16xf32>
    %24 = arith.divf %22, %23 : vector<1x16xf32>
    %c0_17 = arith.constant 0 : index
    %c0_18 = arith.constant 0 : index
    %25 = vector.load %arg8[%c0_17, %c0_18] : memref<1x16xf32, #tpu.memory_space<vmem>>, vector<1x16xf32>
    tpu.vector_store %arg8[%c0_17, %c0_18], %24 {strides = array<i32>} : memref<1x16xf32, #tpu.memory_space<vmem>>, vector<1x16xf32>,
    return
  }
  func.func @transform_0(%arg0: i32) -> (i32, i32) {
    %c0_i32 = arith.constant 0 : i32
    %c0_i32_0 = arith.constant 0 : i32
    return %arg0, %c0_i32 : i32, i32
  }
  func.func @transform_1(%arg0: i32) -> (i32, i32) {
    %c0_i32 = arith.constant 0 : i32
    %c0_i32_0 = arith.constant 0 : i32
    %c0_i32_1 = arith.constant 0 : i32
    return %c0_i32, %c0_i32_0 : i32, i32
  }
  func.func @transform_2(%arg0: i32) -> (i32, i32) {
    %c0_i32 = arith.constant 0 : i32
    %c0_i32_0 = arith.constant 0 : i32
    %c0_i32_1 = arith.constant 0 : i32
    return %c0_i32, %c0_i32_0 : i32, i32
  }
  func.func @transform_3(%arg0: i32) -> (i32, i32) {
    %c0_i32 = arith.constant 0 : i32
    %c0_i32_0 = arith.constant 0 : i32
    %c0_i32_1 = arith.constant 0 : i32
    return %c0_i32, %c0_i32_0 : i32, i32
  }
  func.func @transform_4(%arg0: i32) -> (i32, i32) {
    %c0_i32 = arith.constant 0 : i32
    %c0_i32_0 = arith.constant 0 : i32
    %c0_i32_1 = arith.constant 0 : i32
    return %c0_i32, %c0_i32_0 : i32, i32
  }
  func.func @transform_5(%arg0: i32) -> (i32, i32) {
    %c0_i32 = arith.constant 0 : i32
    %c0_i32_0 = arith.constant 0 : i32
    %c0_i32_1 = arith.constant 0 : i32
    return %c0_i32, %c0_i32_0 : i32, i32
  }
  func.func @transform_6(%arg0: i32) -> i32 {
    %c0_i32 = arith.constant 0 : i32
    %c0_i32_0 = arith.constant 0 : i32
    return %c0_i32 : i32
  }
  func.func @transform_7(%arg0: i32) -> (i32, i32) {
    %c0_i32 = arith.constant 0 : i32
    %c0_i32_0 = arith.constant 0 : i32
    return %arg0, %c0_i32 : i32, i32
  }
}

</mosaic_0001>

<llo_original>
// kernel: tpu_custom_call.1
$region0: #{tpu_custom_call.1}
  #allocation0 [shape = 'u32[]', space=smem, size = 0x4, offset = 0x4, fixed_abs, tag = 'smem constant byte address 0x4 - core index']
  #allocation1 [shape = 'u32[72,128]{1,0:T(1,128)}', space=vmem, size = 0x9000, scoped, tag = 'internal scratch']
  #allocation2 [shape = 'f32[1]{0:T(128)S(6)}', space=smem, size = 0x200, scoped, tag = 'scoped memory for tpu_custom_call.1']
  %s0 = inlined_call_operand.hbm [shape: f32[16,128], index: 0, kind: input, shape index: {}]
  %s1 = inlined_call_operand.hbm [shape: f32[128,128], index: 1, kind: input, shape index: {}]
  %s2 = inlined_call_operand.vmem [shape: f32[1,128], index: 2, kind: input, shape index: {}]
  %s3 = inlined_call_operand.hbm [shape: f32[128,128], index: 3, kind: input, shape index: {}]
  %s4 = inlined_call_operand.vmem [shape: f32[1,128], index: 4, kind: input, shape index: {}]
  %s5 = inlined_call_operand.vmem [shape: f32[1,128], index: 5, kind: input, shape index: {}]
  %s6 = inlined_call_operand.<no memory space> [shape: f32[1], index: 6, kind: input, shape index: {}]
  %s7 = inlined_call_operand.hbm [shape: f32[1,16], index: 7, kind: output, shape index: {}]
  %s8 = sld [smem:[#allocation0]]
  $region50: #{tpu_custom_call.1} parent=0
    _
  %s10 = ssub.s32 1, %s8
  %s11 = scalar_select 0, %s10, %s8
  %12 = sst [smem:[#allocation2]] %s6
  $region1: #{tpu_custom_call.1} parent=0
    #allocation3 [shape = 'u8[8192]{0}', space=vmem, size = 0x2000, scoped, tag = 'input window, operand 0, single buffered']
    #allocation4 [shape = 's32[1]{0}', space=sflag, size = 0x4, scoped, tag = 'scoped memory for tpu_custom_call.1']
    #allocation5 [shape = 's32[1]{0}', space=sflag, size = 0x4, scoped, tag = 'scoped memory for tpu_custom_call.1']
    #allocation6 [shape = 'u8[65536]{0}', space=vmem, size = 0x10000, scoped, tag = 'input window, operand 1, single buffered']
    #allocation7 [shape = 's32[1]{0}', space=sflag, size = 0x4, scoped, tag = 'scoped memory for tpu_custom_call.1']
    #allocation8 [shape = 'u8[65536]{0}', space=vmem, size = 0x10000, scoped, tag = 'input window, operand 3, single buffered']
    #allocation9 [shape = 'u8[512]{0}', space=vmem, size = 0x400, scoped, tag = 'output window, operand 0, single buffered']
    %13 = vsyncpa [#allocation4], 0
    %14 = vsyncpa [#allocation7], 0
    %15 = vsyncpa [#allocation5], 0
    // Predicated region
    $region2: #{tpu_custom_call.1} parent=1 // pred_check
      _
    $region3: #{tpu_custom_call.1} parent=1 // pred_check_branch
      %17 = sbr.rel (0) target = $region5
    $region4: #{tpu_custom_call.1} parent=1 // pred_region
      %19 = vsyncadd [#allocation4], 0
      %s20 = sshll.u32 %s0, 4
      %s21 = int_to_ptr.hbm [resolvable:$true] %s20
      %s22 = sshll.u32 [#allocation3], 4
      %s23 = int_to_ptr.vmem [resolvable:$true] %s22
      %28 = dma.hbm_to_vmem [thread:$0]  %s21, 256, %s23, [#allocation4], 128, 128, 8
    $region5: #{tpu_custom_call.1} parent=1 // pred_fallthru
      _
    // Predicated region
    $region6: #{tpu_custom_call.1} parent=1 // pred_check
      _
    $region7: #{tpu_custom_call.1} parent=1 // pred_check_branch
      %30 = sbr.rel (0) target = $region9
    $region8: #{tpu_custom_call.1} parent=1 // pred_region
      %32 = vsyncadd [#allocation7], 0
      %s33 = sshll.u32 %s1, 4
      %s34 = int_to_ptr.hbm [resolvable:$true] %s33
      %s35 = sshll.u32 [#allocation6], 4
      %s36 = int_to_ptr.vmem [resolvable:$true] %s35
      %41 = dma.hbm_to_vmem [thread:$0]  %s34, 2048, %s36, [#allocation7], 128, 128, 8
    $region9: #{tpu_custom_call.1} parent=1 // pred_fallthru
      _
    // Predicated region
    $region10: #{tpu_custom_call.1} parent=1 // pred_check
      _
    $region11: #{tpu_custom_call.1} parent=1 // pred_check_branch
      %43 = sbr.rel (0) target = $region13
    $region12: #{tpu_custom_call.1} parent=1 // pred_region
      _
    $region13: #{tpu_custom_call.1} parent=1 // pred_fallthru
      _
    // Predicated region
    $region14: #{tpu_custom_call.1} parent=1 // pred_check
      _
    $region15: #{tpu_custom_call.1} parent=1 // pred_check_branch
      %45 = sbr.rel (0) target = $region17
    $region16: #{tpu_custom_call.1} parent=1 // pred_region
      %47 = vsyncadd [#allocation7], 0
      %s48 = sshll.u32 %s3, 4
      %s49 = int_to_ptr.hbm [resolvable:$true] %s48
      %s50 = sshll.u32 [#allocation8], 4
      %s51 = int_to_ptr.vmem [resolvable:$true] %s50
      %56 = dma.hbm_to_vmem [thread:$0]  %s49, 2048, %s51, [#allocation7], 128, 128, 8
    $region17: #{tpu_custom_call.1} parent=1 // pred_fallthru
      _
    // Predicated region
    $region18: #{tpu_custom_call.1} parent=1 // pred_check
      _
    $region19: #{tpu_custom_call.1} parent=1 // pred_check_branch
      %58 = sbr.rel (0) target = $region21
    $region20: #{tpu_custom_call.1} parent=1 // pred_region
      _
    $region21: #{tpu_custom_call.1} parent=1 // pred_fallthru
      _
    // Predicated region
    $region22: #{tpu_custom_call.1} parent=1 // pred_check
      _
    $region23: #{tpu_custom_call.1} parent=1 // pred_check_branch
      %60 = sbr.rel (0) target = $region25
    $region24: #{tpu_custom_call.1} parent=1 // pred_region
      _
    $region25: #{tpu_custom_call.1} parent=1 // pred_fallthru
      _
    // Predicated region
    $region26: #{tpu_custom_call.1} parent=1 // pred_check
      _
    $region27: #{tpu_custom_call.1} parent=1 // pred_check_branch
      %62 = sbr.rel (0) target = $region29
    $region28: #{tpu_custom_call.1} parent=1 // pred_region
      _
    $region29: #{tpu_custom_call.1} parent=1 // pred_fallthru
      _
    // Predicated region
    $region30: #{tpu_custom_call.1} parent=1 // pred_check
      _
    $region31: #{tpu_custom_call.1} parent=1 // pred_check_branch
      %64 = sbr.rel (0) target = $region33
    $region32: #{tpu_custom_call.1} parent=1 // pred_region
      %66 = dma.done [#allocation4], 256
    $region33: #{tpu_custom_call.1} parent=1 // pred_fallthru
      _
    // Predicated region
    $region34: #{tpu_custom_call.1} parent=1 // pred_check
      _
    $region35: #{tpu_custom_call.1} parent=1 // pred_check_branch
      %68 = sbr.rel (0) target = $region37
    $region36: #{tpu_custom_call.1} parent=1 // pred_region
      %70 = dma.done [#allocation7], 2048
    $region37: #{tpu_custom_call.1} parent=1 // pred_fallthru
      _
    // Predicated region
    $region38: #{tpu_custom_call.1} parent=1 // pred_check
      _
    $region39: #{tpu_custom_call.1} parent=1 // pred_check_branch
      %72 = sbr.rel (0) target = $region41
    $region40: #{tpu_custom_call.1} parent=1 // pred_region
      %74 = dma.done [#allocation7], 2048
    $region41: #{tpu_custom_call.1} parent=1 // pred_fallthru
      _
    %v75 = vld [vmem:[#allocation3] sm:$0xff]
    %v76 = vld [vmem:[#allocation3 + $0x8] sm:$0xff]
    %v77 = vld [vmem:[#allocation6] sm:$0xff]
    %v78 = vld [vmem:[#allocation6 + $0x8] sm:$0xff]
    %v79 = vld [vmem:[#allocation6 + $0x10] sm:$0xff]
    %v80 = vld [vmem:[#allocation6 + $0x18] sm:$0xff]
    %v81 = vld [vmem:[#allocation6 + $0x20] sm:$0xff]
    %v82 = vld [vmem:[#allocation6 + $0x28] sm:$0xff]
    %v83 = vld [vmem:[#allocation6 + $0x30] sm:$0xff]
    %v84 = vld [vmem:[#allocation6 + $0x38] sm:$0xff]
    %v85 = vld [vmem:[#allocation6 + $0x40] sm:$0xff]
    %v86 = vld [vmem:[#allocation6 + $0x48] sm:$0xff]
    %v87 = vld [vmem:[#allocation6 + $0x50] sm:$0xff]
    %v88 = vld [vmem:[#allocation6 + $0x58] sm:$0xff]
    %v89 = vld [vmem:[#allocation6 + $0x60] sm:$0xff]
    %v90 = vld [vmem:[#allocation6 + $0x68] sm:$0xff]
    %v91 = vld [vmem:[#allocation6 + $0x70] sm:$0xff]
    %v92 = vld [vmem:[#allocation6 + $0x78] sm:$0xff]
    %v93 = vld [vmem:[%s2] sm:$0x1]
    %v94 = vld [vmem:[#allocation8] sm:$0xff]
    %v95 = vld [vmem:[#allocation8 + $0x8] sm:$0xff]
    %v96 = vld [vmem:[#allocation8 + $0x10] sm:$0xff]
    %v97 = vld [vmem:[#allocation8 + $0x18] sm:$0xff]
    %v98 = vld [vmem:[#allocation8 + $0x20] sm:$0xff]
    %v99 = vld [vmem:[#allocation8 + $0x28] sm:$0xff]
    %v100 = vld [vmem:[#allocation8 + $0x30] sm:$0xff]
    %v101 = vld [vmem:[#allocation8 + $0x38] sm:$0xff]
    %v102 = vld [vmem:[#allocation8 + $0x40] sm:$0xff]
    %v103 = vld [vmem:[#allocation8 + $0x48] sm:$0xff]
    %v104 = vld [vmem:[#allocation8 + $0x50] sm:$0xff]
    %v105 = vld [vmem:[#allocation8 + $0x58] sm:$0xff]
    %v106 = vld [vmem:[#allocation8 + $0x60] sm:$0xff]
    %v107 = vld [vmem:[#allocation8 + $0x68] sm:$0xff]
    %v108 = vld [vmem:[#allocation8 + $0x70] sm:$0xff]
    %v109 = vld [vmem:[#allocation8 + $0x78] sm:$0xff]
    %v110 = vld [vmem:[%s4] sm:$0x1]
    %v111 = vld [vmem:[%s5] sm:$0x1]
    %s112 = sld [smem:[#allocation2]]
    %v114 = vperm.slane %v93, 0
    %116 = vmatpush.msra.mxu0 %v92
    %117 = vmatpush.msra.mxu0 %v91
    %118 = vmatpush.msra.mxu0 %v90
    %119 = vmatpush.msra.mxu0 %v89
    %120 = vmatpush.msra.mxu0 %v88
    %121 = vmatpush.msra.mxu0 %v87
    %122 = vmatpush.msra.mxu0 %v86
    %123 = vmatpush.msra.mxu0 %v85
    %124 = vmatpush.msra.mxu0 %v84
    %125 = vmatpush.msra.mxu0 %v83
    %126 = vmatpush.msra.mxu0 %v82
    %127 = vmatpush.msra.mxu0 %v81
    %128 = vmatpush.msra.mxu0 %v80
    %129 = vmatpush.msra.mxu0 %v79
    %130 = vmatpush.msra.mxu0 %v78
    %131 = vmatpush.msra.mxu0 %v77
    %132 = vmatmul.f32.gmra.mxu0 %v75
    %v133 = vpop.f32.mrf.mxu0
    %v134 = vadd.f32 %v114, %v133
    %135 = vmatmul.f32.gmra.mxu0 %v76
    %v136 = vpop.f32.mrf.mxu0
    %v137 = vadd.f32 %v114, %v136
    %138 = vdwg.mxu0
    %v139 = vmax.f32 %v134, 0.0
    %v140 = vmax.f32 %v137, 0.0
    %v142 = vperm.slane %v110, 0
    %144 = vmatpush.msra.mxu0 %v109
    %145 = vmatpush.msra.mxu0 %v108
    %146 = vmatpush.msra.mxu0 %v107
    %147 = vmatpush.msra.mxu0 %v106
    %148 = vmatpush.msra.mxu0 %v105
    %149 = vmatpush.msra.mxu0 %v104
    %150 = vmatpush.msra.mxu0 %v103
    %151 = vmatpush.msra.mxu0 %v102
    %152 = vmatpush.msra.mxu0 %v101
    %153 = vmatpush.msra.mxu0 %v100
    %154 = vmatpush.msra.mxu0 %v99
    %155 = vmatpush.msra.mxu0 %v98
    %156 = vmatpush.msra.mxu0 %v97
    %157 = vmatpush.msra.mxu0 %v96
    %158 = vmatpush.msra.mxu0 %v95
    %159 = vmatpush.msra.mxu0 %v94
    %160 = vmatmul.f32.gmra.mxu0 %v139
    %v161 = vpop.f32.mrf.mxu0
    %v162 = vadd.f32 %v142, %v161
    %163 = vmatmul.f32.gmra.mxu0 %v140
    %v164 = vpop.f32.mrf.mxu0
    %v165 = vadd.f32 %v142, %v164
    %166 = vdwg.mxu0
    %v167 = vmax.f32 %v162, 0.0
    %v168 = vmax.f32 %v165, 0.0
    %v169 = vstv %s112
    %170 = vmatpush.xpose.msra.mxu0 0.0
    %171 = vmatpush.xpose.msra.mxu0 0.0
    %172 = vmatpush.xpose.msra.mxu0 0.0
    %173 = vmatpush.xpose.msra.mxu0 0.0
    %174 = vmatpush.xpose.msra.mxu0 0.0
    %175 = vmatpush.xpose.msra.mxu0 0.0
    %176 = vmatpush.xpose.msra.mxu0 0.0
    %177 = vmatpush.xpose.msra.mxu0 0.0
    %178 = vmatpush.xpose.msra.mxu0 0.0
    %179 = vmatpush.xpose.msra.mxu0 0.0
    %180 = vmatpush.xpose.msra.mxu0 0.0
    %181 = vmatpush.xpose.msra.mxu0 0.0
    %182 = vmatpush.xpose.msra.mxu0 0.0
    %183 = vmatpush.xpose.msra.mxu0 0.0
    %184 = vmatpush.xpose.msra.mxu0 %v168
    %185 = vmatpush.xpose.msra.mxu0 %v167
    %186 = vmatmul.f32.gmra.mxu0 %v111
    %v187 = vpop.f32.mrf.mxu0
    %v188 = vadd.f32 %v169, %v187
    %189 = vdwg.mxu0
    %v190 = vxor.u32 %v188, 2147483648
    %v191 = vmul.f32 %v190, 1.442695
    %v192 = vpow.pop %v191
    %v193 = vadd.f32 %v192, 1.0
    %v194 = vrcp.pop %v193
    %v195 = vmul.f32 %v193, %v194
    %v196 = vsub.f32 1.0, %v195
    %v197 = vmul.f32 %v194, %v196
    %v198 = vadd.f32 %v194, %v197
    %vm199 = vweird.f32 %v193
    %vm200 = vweird.f32 %v194
    %vm201 = vmor %vm199, %vm200
    %v202 = vsel %vm201, %v194, %v198
    %v203 = vand.u32 2147483647, %v193
    %vm204 = vcmp.eq.f32.partialorder %v203, 8.507059e+37
    %v205 = vand.u32 %v193, 2147483648
    %v206 = vor.u32 1.1754944e-38, %v205
    %v207 = vsel %vm204, %v206, %v202
    %v208 = vmul.f32 1.0, %v207
    %vm209 = vcmask 122880
    %210 = vst.msk [vmem:[#allocation9] sm:$0x1] %vm209, %v208
    // Predicated region
    $region42: #{tpu_custom_call.1} parent=1 // pred_check
      _
    $region43: #{tpu_custom_call.1} parent=1 // pred_check_branch
      %212 = sbr.rel (0) target = $region45
    $region44: #{tpu_custom_call.1} parent=1 // pred_region
      %214 = vsyncadd [#allocation5], 0
      %s216 = sshll.u32 [#allocation9], 4
      %s217 = int_to_ptr.vmem [resolvable:$true] %s216
      %s218 = sshll.u32 %s7, 4
      %s219 = int_to_ptr.hbm [resolvable:$true] %s218
      %221 = dma.vmem_to_hbm [thread:$0]  %s217, 16, %s219, [#allocation5]
    $region45: #{tpu_custom_call.1} parent=1 // pred_fallthru
      _
    // Predicated region
    $region46: #{tpu_custom_call.1} parent=1 // pred_check
      _
    $region47: #{tpu_custom_call.1} parent=1 // pred_check_branch
      %223 = sbr.rel (0) target = $region49
    $region48: #{tpu_custom_call.1} parent=1 // pred_region
      %225 = dma.done [#allocation5], 16
    $region49: #{tpu_custom_call.1} parent=1 // pred_fallthru
      _
    %226 = vsyncpa [#allocation4], 1
    %227 = vsyncpa [#allocation7], 1
    %228 = vsyncpa [#allocation5], 1

</llo_original>
